<compile_context>
chip_gen: v5e
topology: v5e:2x2
jax: 0.10.0
libtpu: 0.0.40
codegen_flags: <defaults>
</compile_context>

<pallas_src>
import jax
import jax.numpy as jnp
from jax.experimental import pallas as pl
from jax.experimental.pallas import tpu as pltpu


def _round_up(x, m):
    return ((x + m - 1) // m) * m


def _make_mlp_params(key, in_dim, out_dim, hidden, layer_n, dtype=jnp.float32):
    """Deterministic params for one MLP: list of (W, b) with W=(in,out), b=(out,)."""
    dims = [in_dim] + [hidden] * (layer_n + 1) + [out_dim]
    params = []
    for i in range(len(dims) - 1):
        key, kw, kb = jax.random.split(key, 3)
        fan_in = dims[i]
        w = jax.random.normal(kw, (dims[i], dims[i + 1]), dtype) / jnp.sqrt(
            jnp.asarray(fan_in, dtype))
        b = 0.1 * jax.random.normal(kb, (dims[i + 1],), dtype)
        params.append((w, b))
    return params


def _make_kernel(n_layers, padw, bias_rows, relu_flags, in_rows):
    """Fused encoder+decoder kernel. Params come in as one packed slab ref."""
    blk = padw + bias_rows  # rows per layer block inside the slab (16-sublane aligned)

    def kernel(x_ref, p_ref, o_ref):
        # Narrow bf16 input tile (tb, in_rows); consumed directly by layer 0 against
        # the top `in_rows` rows of its weight block (rows beyond F are zero).
        h = x_ref[...]                                   # (tb, in_rows) bf16
        for li in range(n_layers):
            off = li * blk                               # static, 16-sublane aligned
            k = in_rows if li == 0 else padw
            w = p_ref[pl.ds(off, k), :]                  # (k, padw)  bf16
            b = p_ref[pl.ds(off + padw, 1), :]           # (1, padw)  bf16
            # MXU: bf16 x bf16 inputs, f32 accumulation.
            acc = jnp.dot(h, w, preferred_element_type=jnp.float32)
            # Elementwise stays in f32 (no bf16 VPU path on v5e).
            acc = acc + b.astype(jnp.float32)
            if relu_flags[li]:
                acc = jnp.maximum(acc, 0.0)
            h = acc.astype(jnp.bfloat16)                 # bf16 carry between layers
        o_ref[...] = h                                   # lane-dense bf16 store

    return kernel


def enc_dec_forward(x, enc_params, dec_params):
    """Fused EncoderDecoderModule.forward as a single pallas_call."""
    B, F = x.shape
    all_params = list(enc_params) + list(dec_params)
    n_enc, n_dec = len(enc_params), len(dec_params)
    relu_flags = [True] * (n_enc - 1) + [False] + [True] * (n_dec - 1) + [False]

    # Common lane-padded feature width for hidden/output dims (padding columns are zero
    # everywhere, so the math is exact).
    max_dim = max([F] + [w.shape[0] for w, _ in all_params]
                  + [w.shape[1] for w, _ in all_params])
    padw = _round_up(max_dim, 128)
    # Narrow input width: only 16-sublane aligned (bf16 packing), NOT lane-padded to 128.
    fp = _round_up(F, 16)

    # --- pack every weight + bias into one bf16 slab (single DMA, VMEM resident) ---
    BIAS_ROWS = 16  # keeps each layer block a multiple of 16 sublanes (bf16 packing)
    blocks = []
    for (w, b) in all_params:
        in_d, out_d = w.shape
        wp = jnp.zeros((padw, padw), jnp.bfloat16)
        wp = wp.at[:in_d, :out_d].set(w.astype(jnp.bfloat16))
        bp = jnp.zeros((BIAS_ROWS, padw), jnp.bfloat16)
        bp = bp.at[0, :out_d].set(b.reshape(-1).astype(jnp.bfloat16))
        blocks += [wp, bp]
    slab = jnp.concatenate(blocks, axis=0)           # (n_layers*(padw+16), padw) bf16

    # --- batch tiling: whole batch in one step when small, 512-row tiles otherwise ---
    if B <= 512:
        tb = _round_up(B, 16)
    else:
        tb = 512
    B_pad = _round_up(B, tb)

    # Narrow bf16 input (no 128-lane f32 padding materialized in HBM).
    xp = jnp.zeros((B_pad, fp), jnp.bfloat16).at[:B, :F].set(x.astype(jnp.bfloat16))

    n_steps = B_pad // tb
    kernel = _make_kernel(len(all_params), padw, BIAS_ROWS, relu_flags, fp)

    out_pad = pl.pallas_call(
        kernel,
        out_shape=jax.ShapeDtypeStruct((B_pad, padw), jnp.bfloat16),
        grid_spec=pltpu.PrefetchScalarGridSpec(
            num_scalar_prefetch=0,
            grid=(n_steps,),
            in_specs=[
                pl.BlockSpec((tb, fp), lambda i: (i, 0)),        # narrow batch tile
                pl.BlockSpec(slab.shape, lambda i: (0, 0)),      # resident param slab
            ],
            out_specs=pl.BlockSpec((tb, padw), lambda i: (i, 0)),
        ),
        compiler_params=pltpu.CompilerParams(
            # Harmless on single-TC v5e/v6e; shards the grid across v7x's 2 TCs.
            dimension_semantics=("parallel",)),
    )(xp, slab)

    return out_pad[:B, :F].astype(x.dtype)


def _reference_forward(x, enc_params, dec_params):
    """Pure-JAX reference mimicking the kernel's bf16 matmul inputs / bf16 carry."""
    all_params = list(enc_params) + list(dec_params)
    n_enc = len(enc_params)
    relu_flags = ([True] * (n_enc - 1) + [False]
                  + [True] * (len(dec_params) - 1) + [False])
    h = x.astype(jnp.bfloat16)
    for li, (w, b) in enumerate(all_params):
        acc = jnp.dot(h, w.astype(jnp.bfloat16), preferred_element_type=jnp.float32)
        acc = acc + b.reshape(1, -1).astype(jnp.bfloat16).astype(jnp.float32)
        if relu_flags[li]:
            acc = jnp.maximum(acc, 0.0)
        h = acc.astype(jnp.bfloat16)
    return h.astype(jnp.float32)


if __name__ == "__main__":
    # Small shapes consistent with the module: flat-feature MLP autoencoder.
    batch = 16
    input_size = 32          # observation size
    latent_space_size = 16
    hidden_size = 32         # args.hidden_size
    layer_N = 1              # args.layer_N

    key = jax.random.PRNGKey(0)
    kx, ke, kd = jax.random.split(key, 3)

    x = jax.random.normal(kx, (batch, input_size), jnp.float32)
    enc_params = _make_mlp_params(ke, input_size, latent_space_size,
                                  hidden_size, layer_N)
    dec_params = _make_mlp_params(kd, latent_space_size, input_size,
                                  hidden_size, layer_N)

    out = enc_dec_forward(x, enc_params, dec_params)
    out = jax.block_until_ready(out)

    ref = _reference_forward(x, enc_params, dec_params)
    assert out.shape == (batch, input_size)
    max_diff = float(jnp.max(jnp.abs(out - ref)))
    assert jnp.allclose(out, ref, atol=2e-2, rtol=2e-2), (
        f"mismatch vs reference (max abs diff = {max_diff})")

    print("KERNEL_OK")
</pallas_src>

<mosaic_0001>
module attributes {stable_mosaic.version = 11 : i64} {
  func.func @kernel(%arg0: i32, %arg1: memref<16x32xbf16, #tpu.memory_space<vmem>>, %arg2: memref<864x128xbf16, #tpu.memory_space<vmem>>, %arg3: memref<16x128xbf16, #tpu.memory_space<vmem>>) attributes {dimension_semantics = [#tpu.dimension_semantics<parallel>], iteration_bounds = array<i64: 1>, scalar_prefetch = 0 : i64, scratch_operands = 0 : i64, tpu.core_type = #tpu.core_type<tc>, window_params = [{transform_indices = @transform_0, window_bounds = array<i64: 16, 32>}, {pipeline_mode = #tpu.pipeline_mode<synchronous>, transform_indices = @transform_1, window_bounds = array<i64: 864, 128>}, {transform_indices = @transform_2, window_bounds = array<i64: 16, 128>}]} {
    %c0 = arith.constant 0 : index
    %c0_0 = arith.constant 0 : index
    %0 = vector.load %arg1[%c0, %c0_0] : memref<16x32xbf16, #tpu.memory_space<vmem>>, vector<16x32xbf16>
    %c0_1 = arith.constant 0 : index
    %c0_2 = arith.constant 0 : index
    %1 = vector.load %arg2[%c0_1, %c0_2] : memref<864x128xbf16, #tpu.memory_space<vmem>>, vector<32x128xbf16>
    %c128 = arith.constant 128 : index
    %c0_3 = arith.constant 0 : index
    %2 = vector.load %arg2[%c128, %c0_3] : memref<864x128xbf16, #tpu.memory_space<vmem>>, vector<1x128xbf16>
    %cst = arith.constant dense<0.000000e+00> : vector<16x128xf32>
    %3 = tpu.matmul %0, %1, %cst {dimension_numbers = #tpu.dot_dimension_numbers<[1], [0], [0], [1], [0, 0, 1, 1], [], []>} : vector<16x32xbf16>, vector<32x128xbf16>, vector<16x128xf32> -> vector<16x128xf32>
    %4 = arith.extf %2 : vector<1x128xbf16> to vector<1x128xf32>
    %5 = vector.broadcast %4 : vector<1x128xf32> to vector<16x128xf32>
    %6 = arith.addf %3, %5 : vector<16x128xf32>
    %cst_4 = arith.constant 0.000000e+00 : f32
    %7 = vector.broadcast %cst_4 : f32 to vector<16x128xf32>
    %8 = arith.maximumf %6, %7 : vector<16x128xf32>
    %9 = arith.truncf %8 : vector<16x128xf32> to vector<16x128xbf16>
    %c144 = arith.constant 144 : index
    %c0_5 = arith.constant 0 : index
    %10 = vector.load %arg2[%c144, %c0_5] : memref<864x128xbf16, #tpu.memory_space<vmem>>, vector<128x128xbf16>
    %c272 = arith.constant 272 : index
    %c0_6 = arith.constant 0 : index
    %11 = vector.load %arg2[%c272, %c0_6] : memref<864x128xbf16, #tpu.memory_space<vmem>>, vector<1x128xbf16>
    %cst_7 = arith.constant dense<0.000000e+00> : vector<16x128xf32>
    %12 = tpu.matmul %9, %10, %cst_7 {dimension_numbers = #tpu.dot_dimension_numbers<[1], [0], [0], [1], [0, 0, 1, 1], [], []>} : vector<16x128xbf16>, vector<128x128xbf16>, vector<16x128xf32> -> vector<16x128xf32>
    %13 = arith.extf %11 : vector<1x128xbf16> to vector<1x128xf32>
    %14 = vector.broadcast %13 : vector<1x128xf32> to vector<16x128xf32>
    %15 = arith.addf %12, %14 : vector<16x128xf32>
    %cst_8 = arith.constant 0.000000e+00 : f32
    %16 = vector.broadcast %cst_8 : f32 to vector<16x128xf32>
    %17 = arith.maximumf %15, %16 : vector<16x128xf32>
    %18 = arith.truncf %17 : vector<16x128xf32> to vector<16x128xbf16>
    %c288 = arith.constant 288 : index
    %c0_9 = arith.constant 0 : index
    %19 = vector.load %arg2[%c288, %c0_9] : memref<864x128xbf16, #tpu.memory_space<vmem>>, vector<128x128xbf16>
    %c416 = arith.constant 416 : index
    %c0_10 = arith.constant 0 : index
    %20 = vector.load %arg2[%c416, %c0_10] : memref<864x128xbf16, #tpu.memory_space<vmem>>, vector<1x128xbf16>
    %cst_11 = arith.constant dense<0.000000e+00> : vector<16x128xf32>
    %21 = tpu.matmul %18, %19, %cst_11 {dimension_numbers = #tpu.dot_dimension_numbers<[1], [0], [0], [1], [0, 0, 1, 1], [], []>} : vector<16x128xbf16>, vector<128x128xbf16>, vector<16x128xf32> -> vector<16x128xf32>
    %22 = arith.extf %20 : vector<1x128xbf16> to vector<1x128xf32>
    %23 = vector.broadcast %22 : vector<1x128xf32> to vector<16x128xf32>
    %24 = arith.addf %21, %23 : vector<16x128xf32>
    %25 = arith.truncf %24 : vector<16x128xf32> to vector<16x128xbf16>
    %c432 = arith.constant 432 : index
    %c0_12 = arith.constant 0 : index
    %26 = vector.load %arg2[%c432, %c0_12] : memref<864x128xbf16, #tpu.memory_space<vmem>>, vector<128x128xbf16>
    %c560 = arith.constant 560 : index
    %c0_13 = arith.constant 0 : index
    %27 = vector.load %arg2[%c560, %c0_13] : memref<864x128xbf16, #tpu.memory_space<vmem>>, vector<1x128xbf16>
    %cst_14 = arith.constant dense<0.000000e+00> : vector<16x128xf32>
    %28 = tpu.matmul %25, %26, %cst_14 {dimension_numbers = #tpu.dot_dimension_numbers<[1], [0], [0], [1], [0, 0, 1, 1], [], []>} : vector<16x128xbf16>, vector<128x128xbf16>, vector<16x128xf32> -> vector<16x128xf32>
    %29 = arith.extf %27 : vector<1x128xbf16> to vector<1x128xf32>
    %30 = vector.broadcast %29 : vector<1x128xf32> to vector<16x128xf32>
    %31 = arith.addf %28, %30 : vector<16x128xf32>
    %cst_15 = arith.constant 0.000000e+00 : f32
    %32 = vector.broadcast %cst_15 : f32 to vector<16x128xf32>
    %33 = arith.maximumf %31, %32 : vector<16x128xf32>
    %34 = arith.truncf %33 : vector<16x128xf32> to vector<16x128xbf16>
    %c576 = arith.constant 576 : index
    %c0_16 = arith.constant 0 : index
    %35 = vector.load %arg2[%c576, %c0_16] : memref<864x128xbf16, #tpu.memory_space<vmem>>, vector<128x128xbf16>
    %c704 = arith.constant 704 : index
    %c0_17 = arith.constant 0 : index
    %36 = vector.load %arg2[%c704, %c0_17] : memref<864x128xbf16, #tpu.memory_space<vmem>>, vector<1x128xbf16>
    %cst_18 = arith.constant dense<0.000000e+00> : vector<16x128xf32>
    %37 = tpu.matmul %34, %35, %cst_18 {dimension_numbers = #tpu.dot_dimension_numbers<[1], [0], [0], [1], [0, 0, 1, 1], [], []>} : vector<16x128xbf16>, vector<128x128xbf16>, vector<16x128xf32> -> vector<16x128xf32>
    %38 = arith.extf %36 : vector<1x128xbf16> to vector<1x128xf32>
    %39 = vector.broadcast %38 : vector<1x128xf32> to vector<16x128xf32>
    %40 = arith.addf %37, %39 : vector<16x128xf32>
    %cst_19 = arith.constant 0.000000e+00 : f32
    %41 = vector.broadcast %cst_19 : f32 to vector<16x128xf32>
    %42 = arith.maximumf %40, %41 : vector<16x128xf32>
    %43 = arith.truncf %42 : vector<16x128xf32> to vector<16x128xbf16>
    %c720 = arith.constant 720 : index
    %c0_20 = arith.constant 0 : index
    %44 = vector.load %arg2[%c720, %c0_20] : memref<864x128xbf16, #tpu.memory_space<vmem>>, vector<128x128xbf16>
    %c848 = arith.constant 848 : index
    %c0_21 = arith.constant 0 : index
    %45 = vector.load %arg2[%c848, %c0_21] : memref<864x128xbf16, #tpu.memory_space<vmem>>, vector<1x128xbf16>
    %cst_22 = arith.constant dense<0.000000e+00> : vector<16x128xf32>
    %46 = tpu.matmul %43, %44, %cst_22 {dimension_numbers = #tpu.dot_dimension_numbers<[1], [0], [0], [1], [0, 0, 1, 1], [], []>} : vector<16x128xbf16>, vector<128x128xbf16>, vector<16x128xf32> -> vector<16x128xf32>
    %47 = arith.extf %45 : vector<1x128xbf16> to vector<1x128xf32>
    %48 = vector.broadcast %47 : vector<1x128xf32> to vector<16x128xf32>
    %49 = arith.addf %46, %48 : vector<16x128xf32>
    %50 = arith.truncf %49 : vector<16x128xf32> to vector<16x128xbf16>
    %c0_23 = arith.constant 0 : index
    %c0_24 = arith.constant 0 : index
    %51 = vector.load %arg3[%c0_23, %c0_24] : memref<16x128xbf16, #tpu.memory_space<vmem>>, vector<16x128xbf16>
    tpu.vector_store %arg3[%c0_23, %c0_24], %50 {strides = array<i32>} : memref<16x128xbf16, #tpu.memory_space<vmem>>, vector<16x128xbf16>,
    return
  }
  func.func @transform_0(%arg0: i32) -> (i32, i32) {
    %c0_i32 = arith.constant 0 : i32
    %c0_i32_0 = arith.constant 0 : i32
    return %arg0, %c0_i32 : i32, i32
  }
  func.func @transform_1(%arg0: i32) -> (i32, i32) {
    %c0_i32 = arith.constant 0 : i32
    %c0_i32_0 = arith.constant 0 : i32
    %c0_i32_1 = arith.constant 0 : i32
    return %c0_i32, %c0_i32_0 : i32, i32
  }
  func.func @transform_2(%arg0: i32) -> (i32, i32) {
    %c0_i32 = arith.constant 0 : i32
    %c0_i32_0 = arith.constant 0 : i32
    return %arg0, %c0_i32 : i32, i32
  }
}

</mosaic_0001>

<llo_original>
// kernel: tpu_custom_call.1
$region0: #{tpu_custom_call.1}
  #allocation0 [shape = 'u32[]', space=smem, size = 0x4, offset = 0x4, fixed_abs, tag = 'smem constant byte address 0x4 - core index']
  #allocation1 [shape = 'u32[72,128]{1,0:T(1,128)}', space=vmem, size = 0x9000, scoped, tag = 'internal scratch']
  %s0 = inlined_call_operand.hbm [shape: bf16[16,32], index: 0, kind: input, shape index: {}]
  %s1 = inlined_call_operand.hbm [shape: bf16[864,128], index: 1, kind: input, shape index: {}]
  %s2 = inlined_call_operand.hbm [shape: bf16[16,128], index: 2, kind: output, shape index: {}]
  %s3 = sld [smem:[#allocation0]]
  $region26: #{tpu_custom_call.1} parent=0
    _
  %s5 = ssub.s32 1, %s3
  %s6 = scalar_select 0, %s5, %s3
  $region1: #{tpu_custom_call.1} parent=0
    #allocation2 [shape = 'u8[4096]{0}', space=vmem, size = 0x1000, scoped, tag = 'input window, operand 0, single buffered']
    #allocation3 [shape = 's32[1]{0}', space=sflag, size = 0x4, scoped, tag = 'scoped memory for tpu_custom_call.1']
    #allocation4 [shape = 's32[1]{0}', space=sflag, size = 0x4, scoped, tag = 'scoped memory for tpu_custom_call.1']
    #allocation5 [shape = 'u8[221184]{0}', space=vmem, size = 0x36000, scoped, tag = 'input window, operand 1, single buffered']
    #allocation6 [shape = 's32[1]{0}', space=sflag, size = 0x4, scoped, tag = 'scoped memory for tpu_custom_call.1']
    #allocation7 [shape = 'u8[4096]{0}', space=vmem, size = 0x1000, scoped, tag = 'output window, operand 0, single buffered']
    %7 = vsyncpa [#allocation3], 0
    %8 = vsyncpa [#allocation6], 0
    %9 = vsyncpa [#allocation4], 0
    // Predicated region
    $region2: #{tpu_custom_call.1} parent=1 // pred_check
      _
    $region3: #{tpu_custom_call.1} parent=1 // pred_check_branch
      %11 = sbr.rel (0) target = $region5
    $region4: #{tpu_custom_call.1} parent=1 // pred_region
      %13 = vsyncadd [#allocation3], 0
      %s14 = sshll.u32 %s0, 4
      %s15 = int_to_ptr.hbm [resolvable:$true] %s14
      %s16 = sshll.u32 [#allocation2], 4
      %s17 = int_to_ptr.vmem [resolvable:$true] %s16
      %22 = dma.hbm_to_vmem [thread:$0]  %s15, 128, %s17, [#allocation3], 64, 64, 4
    $region5: #{tpu_custom_call.1} parent=1 // pred_fallthru
      _
    // Predicated region
    $region6: #{tpu_custom_call.1} parent=1 // pred_check
      _
    $region7: #{tpu_custom_call.1} parent=1 // pred_check_branch
      %24 = sbr.rel (0) target = $region9
    $region8: #{tpu_custom_call.1} parent=1 // pred_region
      %26 = vsyncadd [#allocation6], 0
      %s27 = sshll.u32 %s1, 4
      %s28 = int_to_ptr.hbm [resolvable:$true] %s27
      %s29 = sshll.u32 [#allocation5], 4
      %s30 = int_to_ptr.vmem [resolvable:$true] %s29
      %35 = dma.hbm_to_vmem [thread:$0]  %s28, 6912, %s30, [#allocation6], 64, 64, 4
    $region9: #{tpu_custom_call.1} parent=1 // pred_fallthru
      _
    // Predicated region
    $region10: #{tpu_custom_call.1} parent=1 // pred_check
      _
    $region11: #{tpu_custom_call.1} parent=1 // pred_check_branch
      %37 = sbr.rel (0) target = $region13
    $region12: #{tpu_custom_call.1} parent=1 // pred_region
      %39 = dma.done [#allocation3], 128
    $region13: #{tpu_custom_call.1} parent=1 // pred_fallthru
      _
    // Predicated region
    $region14: #{tpu_custom_call.1} parent=1 // pred_check
      _
    $region15: #{tpu_custom_call.1} parent=1 // pred_check_branch
      %41 = sbr.rel (0) target = $region17
    $region16: #{tpu_custom_call.1} parent=1 // pred_region
      %43 = dma.done [#allocation6], 6912
    $region17: #{tpu_custom_call.1} parent=1 // pred_fallthru
      _
    %v45 = vld [vmem:[#allocation2] sm:$0xf]
    %v46 = vld [vmem:[#allocation2 + $0x4] sm:$0xf]
    %v47 = vld [vmem:[#allocation5] sm:$0xf]
    %v48 = vld [vmem:[#allocation5 + $0x4] sm:$0xf]
    %v49 = vld [vmem:[#allocation5 + $0x8] sm:$0xf]
    %v50 = vld [vmem:[#allocation5 + $0xc] sm:$0xf]
    %v51 = vld [vmem:[#allocation5 + $0x40] sm:$0x1]
    %v52 = vunpack.c.l.bf16 %v51
    %v53 = vperm.slane %v52, 0
    %v56 = vunpack.c.l.b16 %v45
    %v57 = vunpack.c.l.b16 %v46
    %v58 = vpack.c.b16 %v57, %v56
    %v63 = vunpack.c.l.b16 %v47
    %v64 = vunpack.c.l.b16 %v48
    %v65 = vunpack.c.l.b16 %v49
    %v66 = vunpack.c.l.b16 %v50
    %v67 = vpack.c.b16 %v64, %v63
    %v68 = vpack.c.b16 %v66, %v65
    %vm71 = vcmask 261120
    %v73 = vsel %vm71, %v58, 0
    %75 = vmatpush.bf16.msra.mxu0 0
    %76 = vmatpush.bf16.msra.mxu0 0
    %77 = vmatpush.bf16.msra.mxu0 0
    %78 = vmatpush.bf16.msra.mxu0 0
    %79 = vmatpush.bf16.msra.mxu0 0
    %80 = vmatpush.bf16.msra.mxu0 0
    %81 = vmatpush.bf16.msra.mxu0 %v68
    %82 = vmatpush.bf16.msra.mxu0 %v67
    %83 = vmatmul.bf16.gmra.mxu0 %v73
    %v84 = vpop.f32.mrf.mxu0
    %v85 = vadd.f32 %v53, %v84
    %v86 = vpop.f32.mrf.mxu0
    %v87 = vadd.f32 %v53, %v86
    %88 = vdwg.mxu0
    %v89 = vmax.f32 %v85, 0.0
    %v90 = vmax.f32 %v87, 0.0
    %v91 = vpack.c.bf16 %v90, %v89
    %v92 = vld [vmem:[#allocation5 + $0x48] sm:$0xf]
    %v93 = vld [vmem:[#allocation5 + $0x4c] sm:$0xf]
    %v94 = vld [vmem:[#allocation5 + $0x50] sm:$0xf]
    %v95 = vld [vmem:[#allocation5 + $0x54] sm:$0xf]
    %v96 = vld [vmem:[#allocation5 + $0x58] sm:$0xf]
    %v97 = vld [vmem:[#allocation5 + $0x5c] sm:$0xf]
    %v98 = vld [vmem:[#allocation5 + $0x60] sm:$0xf]
    %v99 = vld [vmem:[#allocation5 + $0x64] sm:$0xf]
    %v100 = vld [vmem:[#allocation5 + $0x68] sm:$0xf]
    %v101 = vld [vmem:[#allocation5 + $0x6c] sm:$0xf]
    %v102 = vld [vmem:[#allocation5 + $0x70] sm:$0xf]
    %v103 = vld [vmem:[#allocation5 + $0x74] sm:$0xf]
    %v104 = vld [vmem:[#allocation5 + $0x78] sm:$0xf]
    %v105 = vld [vmem:[#allocation5 + $0x7c] sm:$0xf]
    %v106 = vld [vmem:[#allocation5 + $0x80] sm:$0xf]
    %v107 = vld [vmem:[#allocation5 + $0x84] sm:$0xf]
    %v108 = vld [vmem:[#allocation5 + $0x88] sm:$0x1]
    %v109 = vunpack.c.l.bf16 %v108
    %v110 = vperm.slane %v109, 0
    %v127 = vunpack.c.l.b16 %v92
    %v128 = vunpack.c.l.b16 %v93
    %v129 = vunpack.c.l.b16 %v94
    %v130 = vunpack.c.l.b16 %v95
    %v131 = vunpack.c.l.b16 %v96
    %v132 = vunpack.c.l.b16 %v97
    %v133 = vunpack.c.l.b16 %v98
    %v134 = vunpack.c.l.b16 %v99
    %v135 = vunpack.c.l.b16 %v100
    %v136 = vunpack.c.l.b16 %v101
    %v137 = vunpack.c.l.b16 %v102
    %v138 = vunpack.c.l.b16 %v103
    %v139 = vunpack.c.l.b16 %v104
    %v140 = vunpack.c.l.b16 %v105
    %v141 = vunpack.c.l.b16 %v106
    %v142 = vunpack.c.l.b16 %v107
    %v143 = vpack.c.b16 %v128, %v127
    %v144 = vpack.c.b16 %v130, %v129
    %v145 = vpack.c.b16 %v132, %v131
    %v146 = vpack.c.b16 %v134, %v133
    %v147 = vpack.c.b16 %v136, %v135
    %v148 = vpack.c.b16 %v138, %v137
    %v149 = vpack.c.b16 %v140, %v139
    %v150 = vpack.c.b16 %v142, %v141
    %159 = vmatpush.bf16.msra.mxu0 %v150
    %160 = vmatpush.bf16.msra.mxu0 %v149
    %161 = vmatpush.bf16.msra.mxu0 %v148
    %162 = vmatpush.bf16.msra.mxu0 %v147
    %163 = vmatpush.bf16.msra.mxu0 %v146
    %164 = vmatpush.bf16.msra.mxu0 %v145
    %165 = vmatpush.bf16.msra.mxu0 %v144
    %166 = vmatpush.bf16.msra.mxu0 %v143
    %167 = vmatmul.bf16.gmra.mxu0 %v91
    %v168 = vpop.f32.mrf.mxu0
    %v169 = vadd.f32 %v110, %v168
    %v170 = vpop.f32.mrf.mxu0
    %v171 = vadd.f32 %v110, %v170
    %172 = vdwg.mxu0
    %v173 = vmax.f32 %v169, 0.0
    %v174 = vmax.f32 %v171, 0.0
    %v175 = vpack.c.bf16 %v174, %v173
    %v176 = vld [vmem:[#allocation5 + $0x90] sm:$0xf]
    %v177 = vld [vmem:[#allocation5 + $0x94] sm:$0xf]
    %v178 = vld [vmem:[#allocation5 + $0x98] sm:$0xf]
    %v179 = vld [vmem:[#allocation5 + $0x9c] sm:$0xf]
    %v180 = vld [vmem:[#allocation5 + $0xa0] sm:$0xf]
    %v181 = vld [vmem:[#allocation5 + $0xa4] sm:$0xf]
    %v182 = vld [vmem:[#allocation5 + $0xa8] sm:$0xf]
    %v183 = vld [vmem:[#allocation5 + $0xac] sm:$0xf]
    %v184 = vld [vmem:[#allocation5 + $0xb0] sm:$0xf]
    %v185 = vld [vmem:[#allocation5 + $0xb4] sm:$0xf]
    %v186 = vld [vmem:[#allocation5 + $0xb8] sm:$0xf]
    %v187 = vld [vmem:[#allocation5 + $0xbc] sm:$0xf]
    %v188 = vld [vmem:[#allocation5 + $0xc0] sm:$0xf]
    %v189 = vld [vmem:[#allocation5 + $0xc4] sm:$0xf]
    %v190 = vld [vmem:[#allocation5 + $0xc8] sm:$0xf]
    %v191 = vld [vmem:[#allocation5 + $0xcc] sm:$0xf]
    %v192 = vld [vmem:[#allocation5 + $0xd0] sm:$0x1]
    %v193 = vunpack.c.l.bf16 %v192
    %v194 = vperm.slane %v193, 0
    %v211 = vunpack.c.l.b16 %v176
    %v212 = vunpack.c.l.b16 %v177
    %v213 = vunpack.c.l.b16 %v178
    %v214 = vunpack.c.l.b16 %v179
    %v215 = vunpack.c.l.b16 %v180
    %v216 = vunpack.c.l.b16 %v181
    %v217 = vunpack.c.l.b16 %v182
    %v218 = vunpack.c.l.b16 %v183
    %v219 = vunpack.c.l.b16 %v184
    %v220 = vunpack.c.l.b16 %v185
    %v221 = vunpack.c.l.b16 %v186
    %v222 = vunpack.c.l.b16 %v187
    %v223 = vunpack.c.l.b16 %v188
    %v224 = vunpack.c.l.b16 %v189
    %v225 = vunpack.c.l.b16 %v190
    %v226 = vunpack.c.l.b16 %v191
    %v227 = vpack.c.b16 %v212, %v211
    %v228 = vpack.c.b16 %v214, %v213
    %v229 = vpack.c.b16 %v216, %v215
    %v230 = vpack.c.b16 %v218, %v217
    %v231 = vpack.c.b16 %v220, %v219
    %v232 = vpack.c.b16 %v222, %v221
    %v233 = vpack.c.b16 %v224, %v223
    %v234 = vpack.c.b16 %v226, %v225
    %243 = vmatpush.bf16.msra.mxu0 %v234
    %244 = vmatpush.bf16.msra.mxu0 %v233
    %245 = vmatpush.bf16.msra.mxu0 %v232
    %246 = vmatpush.bf16.msra.mxu0 %v231
    %247 = vmatpush.bf16.msra.mxu0 %v230
    %248 = vmatpush.bf16.msra.mxu0 %v229
    %249 = vmatpush.bf16.msra.mxu0 %v228
    %250 = vmatpush.bf16.msra.mxu0 %v227
    %251 = vmatmul.bf16.gmra.mxu0 %v175
    %v252 = vpop.f32.mrf.mxu0
    %v253 = vadd.f32 %v194, %v252
    %v254 = vpop.f32.mrf.mxu0
    %v255 = vadd.f32 %v194, %v254
    %256 = vdwg.mxu0
    %v257 = vpack.c.bf16 %v255, %v253
    %v258 = vld [vmem:[#allocation5 + $0xd8] sm:$0xf]
    %v259 = vld [vmem:[#allocation5 + $0xdc] sm:$0xf]
    %v260 = vld [vmem:[#allocation5 + $0xe0] sm:$0xf]
    %v261 = vld [vmem:[#allocation5 + $0xe4] sm:$0xf]
    %v262 = vld [vmem:[#allocation5 + $0xe8] sm:$0xf]
    %v263 = vld [vmem:[#allocation5 + $0xec] sm:$0xf]
    %v264 = vld [vmem:[#allocation5 + $0xf0] sm:$0xf]
    %v265 = vld [vmem:[#allocation5 + $0xf4] sm:$0xf]
    %v266 = vld [vmem:[#allocation5 + $0xf8] sm:$0xf]
    %v267 = vld [vmem:[#allocation5 + $0xfc] sm:$0xf]
    %v268 = vld [vmem:[#allocation5 + $0x100] sm:$0xf]
    %v269 = vld [vmem:[#allocation5 + $0x104] sm:$0xf]
    %v270 = vld [vmem:[#allocation5 + $0x108] sm:$0xf]
    %v271 = vld [vmem:[#allocation5 + $0x10c] sm:$0xf]
    %v272 = vld [vmem:[#allocation5 + $0x110] sm:$0xf]
    %v273 = vld [vmem:[#allocation5 + $0x114] sm:$0xf]
    %v274 = vld [vmem:[#allocation5 + $0x118] sm:$0x1]
    %v275 = vunpack.c.l.bf16 %v274
    %v276 = vperm.slane %v275, 0
    %v293 = vunpack.c.l.b16 %v258
    %v294 = vunpack.c.l.b16 %v259
    %v295 = vunpack.c.l.b16 %v260
    %v296 = vunpack.c.l.b16 %v261
    %v297 = vunpack.c.l.b16 %v262
    %v298 = vunpack.c.l.b16 %v263
    %v299 = vunpack.c.l.b16 %v264
    %v300 = vunpack.c.l.b16 %v265
    %v301 = vunpack.c.l.b16 %v266
    %v302 = vunpack.c.l.b16 %v267
    %v303 = vunpack.c.l.b16 %v268
    %v304 = vunpack.c.l.b16 %v269
    %v305 = vunpack.c.l.b16 %v270
    %v306 = vunpack.c.l.b16 %v271
    %v307 = vunpack.c.l.b16 %v272
    %v308 = vunpack.c.l.b16 %v273
    %v309 = vpack.c.b16 %v294, %v293
    %v310 = vpack.c.b16 %v296, %v295
    %v311 = vpack.c.b16 %v298, %v297
    %v312 = vpack.c.b16 %v300, %v299
    %v313 = vpack.c.b16 %v302, %v301
    %v314 = vpack.c.b16 %v304, %v303
    %v315 = vpack.c.b16 %v306, %v305
    %v316 = vpack.c.b16 %v308, %v307
    %325 = vmatpush.bf16.msra.mxu0 %v316
    %326 = vmatpush.bf16.msra.mxu0 %v315
    %327 = vmatpush.bf16.msra.mxu0 %v314
    %328 = vmatpush.bf16.msra.mxu0 %v313
    %329 = vmatpush.bf16.msra.mxu0 %v312
    %330 = vmatpush.bf16.msra.mxu0 %v311
    %331 = vmatpush.bf16.msra.mxu0 %v310
    %332 = vmatpush.bf16.msra.mxu0 %v309
    %333 = vmatmul.bf16.gmra.mxu0 %v257
    %v334 = vpop.f32.mrf.mxu0
    %v335 = vadd.f32 %v276, %v334
    %v336 = vpop.f32.mrf.mxu0
    %v337 = vadd.f32 %v276, %v336
    %338 = vdwg.mxu0
    %v339 = vmax.f32 %v335, 0.0
    %v340 = vmax.f32 %v337, 0.0
    %v341 = vpack.c.bf16 %v340, %v339
    %v342 = vld [vmem:[#allocation5 + $0x120] sm:$0xf]
    %v343 = vld [vmem:[#allocation5 + $0x124] sm:$0xf]
    %v344 = vld [vmem:[#allocation5 + $0x128] sm:$0xf]
    %v345 = vld [vmem:[#allocation5 + $0x12c] sm:$0xf]
    %v346 = vld [vmem:[#allocation5 + $0x130] sm:$0xf]
    %v347 = vld [vmem:[#allocation5 + $0x134] sm:$0xf]
    %v348 = vld [vmem:[#allocation5 + $0x138] sm:$0xf]
    %v349 = vld [vmem:[#allocation5 + $0x13c] sm:$0xf]
    %v350 = vld [vmem:[#allocation5 + $0x140] sm:$0xf]
    %v351 = vld [vmem:[#allocation5 + $0x144] sm:$0xf]
    %v352 = vld [vmem:[#allocation5 + $0x148] sm:$0xf]
    %v353 = vld [vmem:[#allocation5 + $0x14c] sm:$0xf]
    %v354 = vld [vmem:[#allocation5 + $0x150] sm:$0xf]
    %v355 = vld [vmem:[#allocation5 + $0x154] sm:$0xf]
    %v356 = vld [vmem:[#allocation5 + $0x158] sm:$0xf]
    %v357 = vld [vmem:[#allocation5 + $0x15c] sm:$0xf]
    %v358 = vld [vmem:[#allocation5 + $0x160] sm:$0x1]
    %v359 = vunpack.c.l.bf16 %v358
    %v360 = vperm.slane %v359, 0
    %v377 = vunpack.c.l.b16 %v342
    %v378 = vunpack.c.l.b16 %v343
    %v379 = vunpack.c.l.b16 %v344
    %v380 = vunpack.c.l.b16 %v345
    %v381 = vunpack.c.l.b16 %v346
    %v382 = vunpack.c.l.b16 %v347
    %v383 = vunpack.c.l.b16 %v348
    %v384 = vunpack.c.l.b16 %v349
    %v385 = vunpack.c.l.b16 %v350
    %v386 = vunpack.c.l.b16 %v351
    %v387 = vunpack.c.l.b16 %v352
    %v388 = vunpack.c.l.b16 %v353
    %v389 = vunpack.c.l.b16 %v354
    %v390 = vunpack.c.l.b16 %v355
    %v391 = vunpack.c.l.b16 %v356
    %v392 = vunpack.c.l.b16 %v357
    %v393 = vpack.c.b16 %v378, %v377
    %v394 = vpack.c.b16 %v380, %v379
    %v395 = vpack.c.b16 %v382, %v381
    %v396 = vpack.c.b16 %v384, %v383
    %v397 = vpack.c.b16 %v386, %v385
    %v398 = vpack.c.b16 %v388, %v387
    %v399 = vpack.c.b16 %v390, %v389
    %v400 = vpack.c.b16 %v392, %v391
    %409 = vmatpush.bf16.msra.mxu0 %v400
    %410 = vmatpush.bf16.msra.mxu0 %v399
    %411 = vmatpush.bf16.msra.mxu0 %v398
    %412 = vmatpush.bf16.msra.mxu0 %v397
    %413 = vmatpush.bf16.msra.mxu0 %v396
    %414 = vmatpush.bf16.msra.mxu0 %v395
    %415 = vmatpush.bf16.msra.mxu0 %v394
    %416 = vmatpush.bf16.msra.mxu0 %v393
    %417 = vmatmul.bf16.gmra.mxu0 %v341
    %v418 = vpop.f32.mrf.mxu0
    %v419 = vadd.f32 %v360, %v418
    %v420 = vpop.f32.mrf.mxu0
    %v421 = vadd.f32 %v360, %v420
    %422 = vdwg.mxu0
    %v423 = vmax.f32 %v419, 0.0
    %v424 = vmax.f32 %v421, 0.0
    %v425 = vpack.c.bf16 %v424, %v423
    %v426 = vld [vmem:[#allocation5 + $0x168] sm:$0xf]
    %v427 = vld [vmem:[#allocation5 + $0x16c] sm:$0xf]
    %v428 = vld [vmem:[#allocation5 + $0x170] sm:$0xf]
    %v429 = vld [vmem:[#allocation5 + $0x174] sm:$0xf]
    %v430 = vld [vmem:[#allocation5 + $0x178] sm:$0xf]
    %v431 = vld [vmem:[#allocation5 + $0x17c] sm:$0xf]
    %v432 = vld [vmem:[#allocation5 + $0x180] sm:$0xf]
    %v433 = vld [vmem:[#allocation5 + $0x184] sm:$0xf]
    %v434 = vld [vmem:[#allocation5 + $0x188] sm:$0xf]
    %v435 = vld [vmem:[#allocation5 + $0x18c] sm:$0xf]
    %v436 = vld [vmem:[#allocation5 + $0x190] sm:$0xf]
    %v437 = vld [vmem:[#allocation5 + $0x194] sm:$0xf]
    %v438 = vld [vmem:[#allocation5 + $0x198] sm:$0xf]
    %v439 = vld [vmem:[#allocation5 + $0x19c] sm:$0xf]
    %v440 = vld [vmem:[#allocation5 + $0x1a0] sm:$0xf]
    %v441 = vld [vmem:[#allocation5 + $0x1a4] sm:$0xf]
    %v442 = vld [vmem:[#allocation5 + $0x1a8] sm:$0x1]
    %v443 = vunpack.c.l.bf16 %v442
    %v444 = vperm.slane %v443, 0
    %v461 = vunpack.c.l.b16 %v426
    %v462 = vunpack.c.l.b16 %v427
    %v463 = vunpack.c.l.b16 %v428
    %v464 = vunpack.c.l.b16 %v429
    %v465 = vunpack.c.l.b16 %v430
    %v466 = vunpack.c.l.b16 %v431
    %v467 = vunpack.c.l.b16 %v432
    %v468 = vunpack.c.l.b16 %v433
    %v469 = vunpack.c.l.b16 %v434
    %v470 = vunpack.c.l.b16 %v435
    %v471 = vunpack.c.l.b16 %v436
    %v472 = vunpack.c.l.b16 %v437
    %v473 = vunpack.c.l.b16 %v438
    %v474 = vunpack.c.l.b16 %v439
    %v475 = vunpack.c.l.b16 %v440
    %v476 = vunpack.c.l.b16 %v441
    %v477 = vpack.c.b16 %v462, %v461
    %v478 = vpack.c.b16 %v464, %v463
    %v479 = vpack.c.b16 %v466, %v465
    %v480 = vpack.c.b16 %v468, %v467
    %v481 = vpack.c.b16 %v470, %v469
    %v482 = vpack.c.b16 %v472, %v471
    %v483 = vpack.c.b16 %v474, %v473
    %v484 = vpack.c.b16 %v476, %v475
    %493 = vmatpush.bf16.msra.mxu0 %v484
    %494 = vmatpush.bf16.msra.mxu0 %v483
    %495 = vmatpush.bf16.msra.mxu0 %v482
    %496 = vmatpush.bf16.msra.mxu0 %v481
    %497 = vmatpush.bf16.msra.mxu0 %v480
    %498 = vmatpush.bf16.msra.mxu0 %v479
    %499 = vmatpush.bf16.msra.mxu0 %v478
    %500 = vmatpush.bf16.msra.mxu0 %v477
    %501 = vmatmul.bf16.gmra.mxu0 %v425
    %v502 = vpop.f32.mrf.mxu0
    %v503 = vadd.f32 %v444, %v502
    %v504 = vpop.f32.mrf.mxu0
    %v505 = vadd.f32 %v444, %v504
    %506 = vdwg.mxu0
    %v507 = vpack.c.bf16 %v503, %v503
    %v508 = vpack.c.bf16 %v505, %v505
    %509 = vst [vmem:[#allocation7] sm:$0xf] %v507
    %510 = vst [vmem:[#allocation7 + $0x4] sm:$0xf] %v508
    // Predicated region
    $region18: #{tpu_custom_call.1} parent=1 // pred_check
      _
    $region19: #{tpu_custom_call.1} parent=1 // pred_check_branch
      %512 = sbr.rel (0) target = $region21
    $region20: #{tpu_custom_call.1} parent=1 // pred_region
      %514 = vsyncadd [#allocation4], 0
      %s515 = sshll.u32 [#allocation7], 4
      %s516 = int_to_ptr.vmem [resolvable:$true] %s515
      %s517 = sshll.u32 %s2, 4
      %s518 = int_to_ptr.hbm [resolvable:$true] %s517
      %523 = dma.vmem_to_hbm [thread:$0]  %s516, 128, %s518, [#allocation4], 64, 64, 4
    $region21: #{tpu_custom_call.1} parent=1 // pred_fallthru
      _
    // Predicated region
    $region22: #{tpu_custom_call.1} parent=1 // pred_check
      _
    $region23: #{tpu_custom_call.1} parent=1 // pred_check_branch
      %525 = sbr.rel (0) target = $region25
    $region24: #{tpu_custom_call.1} parent=1 // pred_region
      %527 = dma.done [#allocation4], 128
    $region25: #{tpu_custom_call.1} parent=1 // pred_fallthru
      _
    %528 = vsyncpa [#allocation3], 1
    %529 = vsyncpa [#allocation6], 1
    %530 = vsyncpa [#allocation4], 1

</llo_original>
